<compile_context>
chip_gen: v7x
topology: tpu7x:2x2x1
jax: 0.10.0
libtpu: 0.0.40
codegen_flags: <defaults>
</compile_context>

<pallas_src>
import math

import jax
import jax.numpy as jnp
from jax.experimental import pallas as pl
from jax.experimental.pallas import tpu as pltpu

_MIB = 1024 * 1024
# Total budget for the 2x input + 2x output double-buffered tiles (~2 MiB each).
_TILE_VMEM_BUDGET_BYTES = 8 * _MIB


def _round_up(x, m):
    return ((x + m - 1) // m) * m


def _sublane(dtype):
    # Sublane packing multiple: 8 for 32-bit, 16 for bf16/fp16, 32 for int8/fp8.
    return max(8, 32 // jnp.dtype(dtype).itemsize)


def _vmem_limit_bytes():
    cap = None
    try:
        cap = getattr(pltpu.get_tpu_info(), "vmem_capacity_bytes", None)
    except Exception:
        cap = None
    if not cap:
        cap = 64 * _MIB  # assume the smallest per-core VMEM (v7x)
    # <= 48 MiB, keep >= 16 MiB of physical headroom, never below 24 MiB.
    return int(min(48 * _MIB, max(cap - 16 * _MIB, 24 * _MIB)))


def _choose_tiles(rows, width, itemsize, sublane, budget, requested_bm=None):
    """Pick (block_rows, block_width).

    block_width is a multiple of 128 that exactly divides `width` (width is
    always a multiple of 128 after lane-dense folding).  block_rows is a
    multiple of `sublane` (or the full row extent), sized so the
    double-buffered in+out tiles stay under `budget` and the row grid has
    >= 8 balanced steps when the row count allows it.
    """
    # --- lane (width) tile ---
    if 4 * sublane * width * itemsize <= budget:
        bw = width
    else:
        w128 = width // 128
        cap_units = max(1, budget // (4 * sublane * itemsize * 128))
        bw_units = 1
        for cand in range(min(w128, cap_units), 0, -1):
            if w128 % cand == 0:
                bw_units = cand
                break
        bw = bw_units * 128

    # --- row tile ---
    max_bm = max(sublane, (budget // (4 * bw * itemsize)) // sublane * sublane)

    if requested_bm is not None:
        bm = max(1, min(int(requested_bm), rows, max_bm))
        if bm < rows:  # round to the sublane multiple (full extent is legal as-is)
            bm = max(sublane, (bm // sublane) * sublane)
            bm = min(bm, rows)
        return bm, bw

    if rows <= sublane:
        return rows, bw  # full-extent block (legal even if rows % 8 != 0)

    # Target >= 8 row steps (>= 4 per TensorCore on v7x) when possible.
    bm_for_steps = max(sublane, _round_up(pl.cdiv(rows, 8), sublane))
    bm = min(max_bm, bm_for_steps)
    if bm >= rows:
        bm = rows
    return bm, bw


def smart_lerp_kernel(x_ref, t_logits_ref, target_ref, o_ref):
    # t = sigmoid(t_logits); out = x + 2*(t - 0.5)*(target - x)
    # Compute in f32 regardless of the I/O dtype; cast only on store.
    x = x_ref[...].astype(jnp.float32)                    # (bm, bw)
    w = 2.0 * (jax.nn.sigmoid(t_logits_ref[...]) - 0.5)   # (1, bw) f32
    o_ref[...] = (x + w * (target_ref[...] - x)).astype(o_ref.dtype)


def _x_block_spec(bm, bw, n_steps):
    idx = lambda i, j: (i, j)
    # Deepen input prefetch when there are many small steps (review item).
    if n_steps > 32 and hasattr(pl, "Buffered"):
        try:
            return pl.BlockSpec((bm, bw), idx, pipeline_mode=pl.Buffered(3))
        except TypeError:
            pass
    return pl.BlockSpec((bm, bw), idx)


def smart_lerp(x, t_logits, target_value, *, block_rows=None):
    """x: (..., dim); t_logits, target_value: (dim,). Returns same shape as x."""
    orig_shape = x.shape
    dim = orig_shape[-1]
    assert t_logits.shape == (dim,) and target_value.shape == (dim,)

    x2d = x.reshape(-1, dim)
    B = x2d.shape[0]

    t32 = t_logits.astype(jnp.float32)
    v32 = target_value.astype(jnp.float32)

    # Lane-dense folding: make the last (lane) dim a multiple of 128.
    k = 128 // math.gcd(dim, 128)
    if k > 1:
        B_pad = _round_up(max(B, 1), k)
        if B_pad != B:
            x2d = jnp.pad(x2d, ((0, B_pad - B), (0, 0)))
        rows, width = B_pad // k, k * dim
        x_in = x2d.reshape(rows, width)
        t_in = jnp.tile(t32, (k,)).reshape(1, width)
        v_in = jnp.tile(v32, (k,)).reshape(1, width)
    else:
        B_pad = B
        rows, width = B, dim
        x_in = x2d
        t_in = t32.reshape(1, dim)
        v_in = v32.reshape(1, dim)

    itemsize = jnp.dtype(x.dtype).itemsize
    sublane = _sublane(x.dtype)
    bm, bw = _choose_tiles(rows, width, itemsize, sublane,
                           _TILE_VMEM_BUDGET_BYTES, requested_bm=block_rows)

    row_steps = pl.cdiv(rows, bm)
    col_steps = width // bw
    grid = (row_steps, col_steps)
    n_steps = row_steps * col_steps

    cost = pl.CostEstimate(
        flops=3 * rows * width,
        transcendentals=width,
        bytes_accessed=2 * rows * width * itemsize + 2 * width * 4,
    )

    out = pl.pallas_call(
        smart_lerp_kernel,
        out_shape=jax.ShapeDtypeStruct((rows, width), x.dtype),
        grid_spec=pltpu.PrefetchScalarGridSpec(
            num_scalar_prefetch=0,
            grid=grid,
            in_specs=[
                _x_block_spec(bm, bw, n_steps),
                pl.BlockSpec((1, bw), lambda i, j: (0, j)),
                pl.BlockSpec((1, bw), lambda i, j: (0, j)),
            ],
            out_specs=pl.BlockSpec((bm, bw), lambda i, j: (i, j)),
        ),
        compiler_params=pltpu.CompilerParams(
            dimension_semantics=("parallel", "parallel"),
            vmem_limit_bytes=_vmem_limit_bytes(),
        ),
        cost_estimate=cost,
    )(x_in, t_in, v_in)

    out = out.reshape(B_pad, dim)
    if B_pad != B:
        out = out[:B]
    return out.reshape(orig_shape)


def _reference(x, t_logits, target_value):
    t = jax.nn.sigmoid(t_logits.astype(jnp.float32))
    xf = x.astype(jnp.float32)
    return (xf + 2.0 * (t - 0.5) * (target_value.astype(jnp.float32) - xf)).astype(x.dtype)


if __name__ == "__main__":
    key = jax.random.PRNGKey(0)
    ks = jax.random.split(key, 9)

    # 1) Small shape consistent with the module: batch=2, seq=8, hidden(dim)=32.
    batch, seq, dim = 2, 8, 32
    x = jax.random.normal(ks[0], (batch, seq, dim), dtype=jnp.float32)
    t_logits = 0.5 * jax.random.normal(ks[1], (dim,), dtype=jnp.float32)
    target_value = jax.random.normal(ks[2], (dim,), dtype=jnp.float32)
    out = smart_lerp(x, t_logits, target_value)
    jax.block_until_ready(out)
    assert out.shape == x.shape
    assert jnp.allclose(out, _reference(x, t_logits, target_value),
                        atol=1e-5, rtol=1e-5), "mismatch vs reference (small)"

    # 2) Medium shape exercising the multi-step (>= 8 balanced steps) path.
    B2, dim2 = 1024, 256
    x2 = jax.random.normal(ks[3], (B2, dim2), dtype=jnp.float32)
    t2 = 0.5 * jax.random.normal(ks[4], (dim2,), dtype=jnp.float32)
    v2 = jax.random.normal(ks[5], (dim2,), dtype=jnp.float32)
    out2 = smart_lerp(x2, t2, v2)
    jax.block_until_ready(out2)
    assert jnp.allclose(out2, _reference(x2, t2, v2),
                        atol=1e-5, rtol=1e-5), "mismatch vs reference (medium)"

    # 3) bf16 with a row count that needs padding for the lane-dense fold.
    b3, s3, dim3 = 5, 7, 48
    x3 = jax.random.normal(ks[6], (b3, s3, dim3), dtype=jnp.bfloat16)
    t3 = (0.5 * jax.random.normal(ks[7], (dim3,), dtype=jnp.float32))
    v3 = jax.random.normal(ks[8], (dim3,), dtype=jnp.float32)
    out3 = smart_lerp(x3, t3, v3)
    jax.block_until_ready(out3)
    assert out3.shape == x3.shape
    assert jnp.allclose(out3.astype(jnp.float32),
                        _reference(x3, t3, v3).astype(jnp.float32),
                        atol=1e-2, rtol=1e-2), "mismatch vs reference (bf16/padded)"

    print("KERNEL_OK")
</pallas_src>

<mosaic_0001>
module attributes {stable_mosaic.version = 11 : i64} {
  func.func @smart_lerp_kernel(%arg0: i32, %arg1: i32, %arg2: memref<4x128xf32, #tpu.memory_space<vmem>>, %arg3: memref<1x128xf32, #tpu.memory_space<vmem>>, %arg4: memref<1x128xf32, #tpu.memory_space<vmem>>, %arg5: memref<4x128xf32, #tpu.memory_space<vmem>>) attributes {dimension_semantics = [#tpu.dimension_semantics<parallel>, #tpu.dimension_semantics<parallel>], iteration_bounds = array<i64: 1, 1>, scalar_prefetch = 0 : i64, scratch_operands = 0 : i64, tpu.core_type = #tpu.core_type<tc>, window_params = [{transform_indices = @transform_0, window_bounds = array<i64: 4, 128>}, {transform_indices = @transform_1, window_bounds = array<i64: 1, 128>}, {transform_indices = @transform_2, window_bounds = array<i64: 1, 128>}, {transform_indices = @transform_3, window_bounds = array<i64: 4, 128>}]} {
    %c0 = arith.constant 0 : index
    %c0_0 = arith.constant 0 : index
    %0 = vector.load %arg2[%c0, %c0_0] : memref<4x128xf32, #tpu.memory_space<vmem>>, vector<4x128xf32>
    %c0_1 = arith.constant 0 : index
    %c0_2 = arith.constant 0 : index
    %1 = vector.load %arg3[%c0_1, %c0_2] : memref<1x128xf32, #tpu.memory_space<vmem>>, vector<1x128xf32>
    %2 = arith.negf %1 : vector<1x128xf32>
    %3 = math.exp %2 : vector<1x128xf32>
    %cst = arith.constant 1.000000e+00 : f32
    %4 = vector.broadcast %cst : f32 to vector<1x128xf32>
    %5 = arith.addf %4, %3 : vector<1x128xf32>
    %6 = arith.divf %4, %5 : vector<1x128xf32>
    %cst_3 = arith.constant 5.000000e-01 : f32
    %7 = vector.broadcast %cst_3 : f32 to vector<1x128xf32>
    %8 = arith.subf %6, %7 : vector<1x128xf32>
    %cst_4 = arith.constant 2.000000e+00 : f32
    %9 = vector.broadcast %cst_4 : f32 to vector<1x128xf32>
    %10 = arith.mulf %9, %8 : vector<1x128xf32>
    %c0_5 = arith.constant 0 : index
    %c0_6 = arith.constant 0 : index
    %11 = vector.load %arg4[%c0_5, %c0_6] : memref<1x128xf32, #tpu.memory_space<vmem>>, vector<1x128xf32>
    %12 = vector.broadcast %11 : vector<1x128xf32> to vector<4x128xf32>
    %13 = arith.subf %12, %0 : vector<4x128xf32>
    %14 = vector.broadcast %10 : vector<1x128xf32> to vector<4x128xf32>
    %15 = arith.mulf %14, %13 : vector<4x128xf32>
    %16 = arith.addf %0, %15 : vector<4x128xf32>
    %c0_7 = arith.constant 0 : index
    %c0_8 = arith.constant 0 : index
    %17 = vector.load %arg5[%c0_7, %c0_8] : memref<4x128xf32, #tpu.memory_space<vmem>>, vector<4x128xf32>
    tpu.vector_store %arg5[%c0_7, %c0_8], %16 {strides = array<i32>} : memref<4x128xf32, #tpu.memory_space<vmem>>, vector<4x128xf32>,
    return
  }
  func.func @transform_0(%arg0: i32, %arg1: i32) -> (i32, i32) {
    %c0_i32 = arith.constant 0 : i32
    return %arg0, %arg1 : i32, i32
  }
  func.func @transform_1(%arg0: i32, %arg1: i32) -> (i32, i32) {
    %c0_i32 = arith.constant 0 : i32
    %c0_i32_0 = arith.constant 0 : i32
    return %c0_i32, %arg1 : i32, i32
  }
  func.func @transform_2(%arg0: i32, %arg1: i32) -> (i32, i32) {
    %c0_i32 = arith.constant 0 : i32
    %c0_i32_0 = arith.constant 0 : i32
    return %c0_i32, %arg1 : i32, i32
  }
  func.func @transform_3(%arg0: i32, %arg1: i32) -> (i32, i32) {
    %c0_i32 = arith.constant 0 : i32
    return %arg0, %arg1 : i32, i32
  }
}

</mosaic_0001>

<llo_original>
// kernel: tpu_custom_call.1
$region0: #{tpu_custom_call.1}
  #allocation0 [shape = 'u32[]', space=smem, size = 0x4, offset = 0x4, fixed_abs, tag = 'smem constant byte address 0x4 - core index']
  #allocation1 [shape = 'u32[144,128]{1,0:T(1,128)}', space=vmem, size = 0x12000, scoped, tag = 'internal scratch']
  %s0 = inlined_call_operand.hbm [shape: f32[4,128], index: 0, kind: input, shape index: {}]
  %s1 = inlined_call_operand.vmem [shape: f32[1,128], index: 1, kind: input, shape index: {}]
  %s2 = inlined_call_operand.vmem [shape: f32[1,128], index: 2, kind: input, shape index: {}]
  %s3 = inlined_call_operand.hbm [shape: f32[4,128], index: 3, kind: output, shape index: {}]
  %s4 = sld [smem:[#allocation0]]
  $region26: #{tpu_custom_call.1} parent=0
    _
  %s6 = ssub.s32 1, %s4
  %s7 = scalar_select 0, %s6, %s4
  $region1: #{tpu_custom_call.1} parent=0
    #allocation2 [shape = 'u8[2048]{0}', space=vmem, size = 0x800, scoped, tag = 'input window, operand 0, single buffered']
    #allocation3 [shape = 's32[1]{0}', space=sflag, size = 0x4, scoped, tag = 'scoped memory for tpu_custom_call.1']
    #allocation4 [shape = 's32[1]{0}', space=sflag, size = 0x4, scoped, tag = 'scoped memory for tpu_custom_call.1']
    #allocation5 [shape = 'u8[2048]{0}', space=vmem, size = 0x800, scoped, tag = 'output window, operand 0, single buffered']
    %8 = vsyncpa [#allocation3], 0
    %9 = vsyncpa [#allocation4], 0
    // Predicated region
    $region2: #{tpu_custom_call.1} parent=1 // pred_check
      _
    $region3: #{tpu_custom_call.1} parent=1 // pred_check_branch
      %11 = sbr.rel (0) target = $region5
    $region4: #{tpu_custom_call.1} parent=1 // pred_region
      %s13 = ssub.s32 64, 64
      %14 = vsyncadd [#allocation3], %s13
      %s16 = sshll.u32 [#allocation2], 4
      %s17 = int_to_ptr.vmem [resolvable:$true] %s16
      %19 = dma.hbm_to_vmem [thread:$0]  %s0, 64, %s17, [#allocation3]
    $region5: #{tpu_custom_call.1} parent=1 // pred_fallthru
      _
    // Predicated region
    $region6: #{tpu_custom_call.1} parent=1 // pred_check
      _
    $region7: #{tpu_custom_call.1} parent=1 // pred_check_branch
      %21 = sbr.rel (0) target = $region9
    $region8: #{tpu_custom_call.1} parent=1 // pred_region
      _
    $region9: #{tpu_custom_call.1} parent=1 // pred_fallthru
      _
    // Predicated region
    $region10: #{tpu_custom_call.1} parent=1 // pred_check
      _
    $region11: #{tpu_custom_call.1} parent=1 // pred_check_branch
      %23 = sbr.rel (0) target = $region13
    $region12: #{tpu_custom_call.1} parent=1 // pred_region
      _
    $region13: #{tpu_custom_call.1} parent=1 // pred_fallthru
      _
    // Predicated region
    $region14: #{tpu_custom_call.1} parent=1 // pred_check
      _
    $region15: #{tpu_custom_call.1} parent=1 // pred_check_branch
      %25 = sbr.rel (0) target = $region17
    $region16: #{tpu_custom_call.1} parent=1 // pred_region
      %26 = dma.done [#allocation3], 64
    $region17: #{tpu_custom_call.1} parent=1 // pred_fallthru
      _
    %v27 = vld [vmem:[#allocation2] sm:$0xf]
    %v28 = vld [vmem:[%s1] sm:$0x1]
    %v29 = vxor.u32 %v28, 2147483648
    %v30 = vmul.f32 %v29, 1.442695
    %v31 = vpow.pop %v30
    %v32 = vadd.f32 %v31, 1.0
    %v33 = vrcp.pop %v32
    %v34 = vmul.f32 1.0, %v33
    %v35 = vsub.f32 %v34, 0.5
    %v36 = vmul.f32 %v35, 2.0
    %v37 = vld [vmem:[%s2] sm:$0x1]
    %v39 = vlaneseq
    %v40 = vshrl.u32 %v39, 7
    %v41 = vsub.s32 0, %v40
    %v42 = vrot.slane %v37, %v41
    %v44 = vsub.f32 %v42, %v27
    %v46 = vlaneseq
    %v47 = vshrl.u32 %v46, 7
    %v48 = vsub.s32 0, %v47
    %v49 = vrot.slane %v36, %v48
    %v51 = vmul.f32 %v49, %v44
    %v52 = vadd.f32 %v27, %v51
    %53 = vst [vmem:[#allocation5] sm:$0xf] %v52
    // Predicated region
    $region18: #{tpu_custom_call.1} parent=1 // pred_check
      _
    $region19: #{tpu_custom_call.1} parent=1 // pred_check_branch
      %55 = sbr.rel (0) target = $region21
    $region20: #{tpu_custom_call.1} parent=1 // pred_region
      %s57 = ssub.s32 64, 64
      %58 = vsyncadd [#allocation4], %s57
      %s60 = sshll.u32 [#allocation5], 4
      %s61 = int_to_ptr.vmem [resolvable:$true] %s60
      %63 = dma.vmem_to_hbm [thread:$0]  %s61, 64, %s3, [#allocation4]
    $region21: #{tpu_custom_call.1} parent=1 // pred_fallthru
      _
    // Predicated region
    $region22: #{tpu_custom_call.1} parent=1 // pred_check
      _
    $region23: #{tpu_custom_call.1} parent=1 // pred_check_branch
      %65 = sbr.rel (0) target = $region25
    $region24: #{tpu_custom_call.1} parent=1 // pred_region
      %66 = dma.done [#allocation4], 64
    $region25: #{tpu_custom_call.1} parent=1 // pred_fallthru
      _
    %67 = vsyncpa [#allocation3], 1
    %68 = vsyncpa [#allocation4], 1

</llo_original>
